<compile_context>
chip_gen: v5e
topology: v5e:2x2
jax: 0.10.0
libtpu: 0.0.40
codegen_flags: <defaults>
</compile_context>

<pallas_src>
import jax
import jax.numpy as jnp
from jax.experimental import pallas as pl
from jax.experimental.pallas import tpu as pltpu


# ---------------------------------------------------------------------------
# Pallas kernel.  Per grid step it sees one batch tile (features x TB samples):
#   X       = [u; q; u*q]                                   (3D, TB)
#   H_full  = W1s @ X                                       (72, TB)
#   pred    = H_full[64] + (a1[user]+b1[item])              (1,  TB)
#   score   = W3 @ relu(W2 @ relu(H_full[:64] + c1) + c2) + c3
# PyTorch Linear layout (out, in) is used directly: h = W @ x + c with samples
# in columns, so no weight transposes are needed anywhere.
# ---------------------------------------------------------------------------
def multitask_kernel(u_ref, q_ref, ab_ref,
                     w1s_ref, c1_ref, w2_ref, c2_ref, w3_ref, c3_ref,
                     pred_ref, score_ref):
    # u/q arrive as bf16 (HBM-bound streaming); upcast once, compute in f32.
    u = u_ref[...].astype(jnp.float32)            # (D, TB)
    q = q_ref[...].astype(jnp.float32)            # (D, TB)
    uq = u * q                                    # VPU elementwise

    # Sublane-stack [u; q; u*q] -> (3D, TB).  One K=3D MXU matmul computes both
    # the MLP first layer (rows 0..L1-1) and the factorization dot-product
    # reduction (ones-row at row L1).  Rows > L1 are zero padding.
    x = jnp.concatenate([u, q, uq], axis=0)
    h_full = jnp.dot(w1s_ref[...], x, preferred_element_type=jnp.float32)

    l1 = c1_ref.shape[0]
    # Factorization branch: ab = a1[user_ids] + b1[item_ids], pre-added in glue.
    pred_ref[...] = (h_full[l1:l1 + 1, :] + ab_ref[...]).astype(pred_ref.dtype)

    # Regression branch.
    h = jnp.maximum(h_full[:l1, :] + c1_ref[...], 0.0)
    h = jnp.maximum(
        jnp.dot(w2_ref[...], h, preferred_element_type=jnp.float32) + c2_ref[...],
        0.0)
    s = jnp.dot(w3_ref[...], h, preferred_element_type=jnp.float32) + c3_ref[...]
    score_ref[...] = s.astype(score_ref.dtype)    # (1, TB)


# ---------------------------------------------------------------------------
# Wrapper: id padding + embedding gathers + bias pre-add in XLA glue, then a
# batch-tiled pallas_call for everything else.
# ---------------------------------------------------------------------------
def multitask_forward(params, user_ids, item_ids, *, block_b=4096,
                      embed_dtype=jnp.bfloat16):
    """Forward pass matching MultiTaskNet.forward (embedding_sharing=True)."""
    B = user_ids.shape[0]
    D = params["u1"].shape[1]
    L1 = params["c1"].shape[0]

    # ---- batch tile selection: lane-aligned, large (amortizes the ~0.35 us
    # per-grid-step overhead), and capped so there are >= 2 grid steps when
    # there is enough work (v7x megacore sharding of the "parallel" axis).
    if B <= 256:
        TB = max(128, pl.next_power_of_2(B))
    else:
        TB = min(block_b, max(256, pl.next_power_of_2(pl.cdiv(B, 2))))
    assert TB % 128 == 0
    n_blocks = pl.cdiv(B, TB)
    Bp = n_blocks * TB

    # ---- pad the cheap int32 id vectors, not the big (D, B) activations.
    uid, iid = user_ids, item_ids
    if Bp != B:
        uid = jnp.pad(uid, (0, Bp - B))
        iid = jnp.pad(iid, (0, Bp - B))

    # ---- glue: embedding gathers, bf16 downcast, transpose to feature-major
    # (samples on lanes).  ab = a1 + b1 stays f32 (tiny).
    # TODO(synk): fuse the gather into the kernel (scalar-prefetched ids +
    # per-row DMA) to remove the remaining gather/transpose HBM pass.
    u_t = params["u1"][uid].astype(embed_dtype).T          # (D, Bp)
    q_t = params["q1"][iid].astype(embed_dtype).T          # (D, Bp)
    ab = (params["a1"][uid] + params["b1"][iid]).T         # (1, Bp) f32

    # ---- stacked first-layer weight: [[W1u | W1q | W1uq]; ones-row; zero pad].
    # Row L1 computes sum_d(u*q) on the MXU (no XLU cross-lane reduce); rows are
    # padded to a multiple of 8 for clean sublane tiling.
    ones_row = jnp.concatenate(
        [jnp.zeros((1, 2 * D), jnp.float32), jnp.ones((1, D), jnp.float32)], axis=1)
    w1 = jnp.concatenate(
        [params["w1u"], params["w1q"], params["w1uq"]], axis=1)       # (L1, 3D)
    rows_pad = ((L1 + 1 + 7) // 8) * 8
    w1s = jnp.concatenate(
        [w1, ones_row, jnp.zeros((rows_pad - L1 - 1, 3 * D), jnp.float32)], axis=0)

    # Batch-tiled operands stream per grid step; weights get constant index_maps
    # so they stay VMEM-resident across the whole grid.
    def batch_spec(rows):
        return pl.BlockSpec((rows, TB), lambda i: (0, i))

    def const_spec(arr):
        return pl.BlockSpec(arr.shape, lambda i: (0, 0))

    pred, score = pl.pallas_call(
        multitask_kernel,
        out_shape=(jax.ShapeDtypeStruct((1, Bp), jnp.float32),
                   jax.ShapeDtypeStruct((1, Bp), jnp.float32)),
        grid=(n_blocks,),
        in_specs=[batch_spec(D), batch_spec(D), batch_spec(1),
                  const_spec(w1s), const_spec(params["c1"]),
                  const_spec(params["w2"]), const_spec(params["c2"]),
                  const_spec(params["w3"]), const_spec(params["c3"])],
        out_specs=(pl.BlockSpec((1, TB), lambda i: (0, i)),
                   pl.BlockSpec((1, TB), lambda i: (0, i))),
        compiler_params=pltpu.CompilerParams(
            dimension_semantics=("parallel",),
            vmem_limit_bytes=32 * 1024 * 1024),
    )(u_t, q_t, ab, w1s, params["c1"], params["w2"], params["c2"],
      params["w3"], params["c3"])

    # squeeze(1)-equivalent: drop padding, return (B,) vectors.
    return pred[0, :B], score[0, :B]


# ---------------------------------------------------------------------------
# Deterministic parameter init mirroring the PyTorch module shapes/layout.
# Linear weights are stored PyTorch-style (out_features, in_features); the first
# layer is pre-split along its input axis into the [u | q | u*q] blocks.
# ---------------------------------------------------------------------------
def init_params(key, num_users, num_items, embedding_dim=32, layer_sizes=(96, 64)):
    D = embedding_dim
    L0, L1 = layer_sizes
    assert L0 == 3 * D, "layer_sizes[0] must equal 3 * embedding_dim"
    k = jax.random.split(key, 8)

    def linear_init(kw, kb, fan_in, fan_out):
        bound = 1.0 / (fan_in ** 0.5)          # ~ nn.Linear default init
        w = jax.random.uniform(kw, (fan_out, fan_in), jnp.float32, -bound, bound)
        b = jax.random.uniform(kb, (fan_out, 1), jnp.float32, -bound, bound)
        return w, b

    w1, c1 = linear_init(k[2], k[3], L0, L1)
    w2, c2 = linear_init(k[4], k[5], L1, L1)
    w3, c3 = linear_init(k[6], k[7], L1, 1)

    return {
        # ScaledEmbedding: normal(0, 1/embedding_dim)
        "u1": jax.random.normal(k[0], (num_users, D), jnp.float32) / D,
        "q1": jax.random.normal(k[1], (num_items, D), jnp.float32) / D,
        # ZeroEmbedding biases
        "a1": jnp.zeros((num_users, 1), jnp.float32),
        "b1": jnp.zeros((num_items, 1), jnp.float32),
        # Regression MLP
        "w1u": w1[:, :D], "w1q": w1[:, D:2 * D], "w1uq": w1[:, 2 * D:],
        "c1": c1,
        "w2": w2, "c2": c2,
        "w3": w3, "c3": c3,
    }


def reference_forward(params, user_ids, item_ids, embed_dtype=jnp.float32):
    """Pure-JAX reference mirroring the PyTorch forward, for validation.
    `embed_dtype=jnp.bfloat16` applies the same embedding quantization the
    kernel streams, so the comparison tolerance can stay tight."""
    hi = jax.lax.Precision.HIGHEST
    u = params["u1"][user_ids].astype(embed_dtype).astype(jnp.float32)
    q = params["q1"][item_ids].astype(embed_dtype).astype(jnp.float32)
    pred = (jnp.sum(u * q, axis=1)
            + params["a1"][user_ids][:, 0] + params["b1"][item_ids][:, 0])
    w1 = jnp.concatenate([params["w1u"], params["w1q"], params["w1uq"]], axis=1)
    feat = jnp.concatenate([u, q, u * q], axis=1)
    h = jnp.maximum(jnp.dot(feat, w1.T, precision=hi) + params["c1"][:, 0], 0.0)
    h = jnp.maximum(jnp.dot(h, params["w2"].T, precision=hi) + params["c2"][:, 0], 0.0)
    score = (jnp.dot(h, params["w3"].T, precision=hi) + params["c3"][:, 0])[:, 0]
    return pred, score


if __name__ == "__main__":
    key = jax.random.PRNGKey(0)
    num_users, num_items, embedding_dim = 10, 12, 32
    batch = 8

    params = init_params(key, num_users, num_items, embedding_dim, (96, 64))

    ku, ki = jax.random.split(jax.random.PRNGKey(1))
    user_ids = jax.random.randint(ku, (batch,), 0, num_users, dtype=jnp.int32)
    item_ids = jax.random.randint(ki, (batch,), 0, num_items, dtype=jnp.int32)

    pred, score = multitask_forward(params, user_ids, item_ids)
    jax.block_until_ready((pred, score))

    # Compare against a reference using the same bf16 embedding quantization.
    pred_ref, score_ref = reference_forward(params, user_ids, item_ids,
                                            embed_dtype=jnp.bfloat16)
    assert pred.shape == (batch,) and score.shape == (batch,), "Check your shapes!"
    assert jnp.allclose(pred, pred_ref, atol=1e-4, rtol=1e-4), "predictions mismatch"
    assert jnp.allclose(score, score_ref, atol=1e-4, rtol=1e-4), "score mismatch"

    print("KERNEL_OK")
</pallas_src>

<mosaic_0001>
module attributes {stable_mosaic.version = 11 : i64} {
  func.func @multitask_kernel(%arg0: i32, %arg1: memref<32x128xbf16, #tpu.memory_space<vmem>>, %arg2: memref<32x128xbf16, #tpu.memory_space<vmem>>, %arg3: memref<1x128xf32, #tpu.memory_space<vmem>>, %arg4: memref<72x96xf32, #tpu.memory_space<vmem>>, %arg5: memref<64x1xf32, #tpu.memory_space<vmem>>, %arg6: memref<64x64xf32, #tpu.memory_space<vmem>>, %arg7: memref<64x1xf32, #tpu.memory_space<vmem>>, %arg8: memref<1x64xf32, #tpu.memory_space<vmem>>, %arg9: memref<1x1xf32, #tpu.memory_space<vmem>>, %arg10: memref<1x128xf32, #tpu.memory_space<vmem>>, %arg11: memref<1x128xf32, #tpu.memory_space<vmem>>) attributes {dimension_semantics = [#tpu.dimension_semantics<parallel>], iteration_bounds = array<i64: 1>, scalar_prefetch = 0 : i64, scratch_operands = 0 : i64, tpu.core_type = #tpu.core_type<tc>, window_params = [{transform_indices = @transform_0, window_bounds = array<i64: 32, 128>}, {transform_indices = @transform_1, window_bounds = array<i64: 32, 128>}, {transform_indices = @transform_2, window_bounds = array<i64: 1, 128>}, {pipeline_mode = #tpu.pipeline_mode<synchronous>, transform_indices = @transform_3, window_bounds = array<i64: 72, 96>}, {pipeline_mode = #tpu.pipeline_mode<synchronous>, transform_indices = @transform_4, window_bounds = array<i64: 64, 1>}, {pipeline_mode = #tpu.pipeline_mode<synchronous>, transform_indices = @transform_5, window_bounds = array<i64: 64, 64>}, {pipeline_mode = #tpu.pipeline_mode<synchronous>, transform_indices = @transform_6, window_bounds = array<i64: 64, 1>}, {pipeline_mode = #tpu.pipeline_mode<synchronous>, transform_indices = @transform_7, window_bounds = array<i64: 1, 64>}, {pipeline_mode = #tpu.pipeline_mode<synchronous>, transform_indices = @transform_8, window_bounds = array<i64: 1, 1>}, {transform_indices = @transform_9, window_bounds = array<i64: 1, 128>}, {transform_indices = @transform_10, window_bounds = array<i64: 1, 128>}]} {
    %c0 = arith.constant 0 : index
    %c0_0 = arith.constant 0 : index
    %0 = vector.load %arg1[%c0, %c0_0] : memref<32x128xbf16, #tpu.memory_space<vmem>>, vector<32x128xbf16>
    %1 = arith.extf %0 : vector<32x128xbf16> to vector<32x128xf32>
    %c0_1 = arith.constant 0 : index
    %c0_2 = arith.constant 0 : index
    %2 = vector.load %arg2[%c0_1, %c0_2] : memref<32x128xbf16, #tpu.memory_space<vmem>>, vector<32x128xbf16>
    %3 = arith.extf %2 : vector<32x128xbf16> to vector<32x128xf32>
    %4 = arith.mulf %1, %3 : vector<32x128xf32>
    %5 = tpu.concatenate %1, %3, %4 in 0 : vector<32x128xf32>, vector<32x128xf32>, vector<32x128xf32> -> vector<96x128xf32>
    %c0_3 = arith.constant 0 : index
    %c0_4 = arith.constant 0 : index
    %6 = vector.load %arg4[%c0_3, %c0_4] : memref<72x96xf32, #tpu.memory_space<vmem>>, vector<72x96xf32>
    %cst = arith.constant dense<0.000000e+00> : vector<72x128xf32>
    %7 = tpu.matmul %6, %5, %cst {dimension_numbers = #tpu.dot_dimension_numbers<[1], [0], [0], [1], [0, 0, 1, 1], [], []>} : vector<72x96xf32>, vector<96x128xf32>, vector<72x128xf32> -> vector<72x128xf32>
    %8 = vector.extract_strided_slice %7 {offsets = [64, 0], sizes = [1, 128], strides = [1, 1]} : vector<72x128xf32> to vector<1x128xf32>
    %c0_5 = arith.constant 0 : index
    %c0_6 = arith.constant 0 : index
    %9 = vector.load %arg3[%c0_5, %c0_6] : memref<1x128xf32, #tpu.memory_space<vmem>>, vector<1x128xf32>
    %10 = arith.addf %8, %9 : vector<1x128xf32>
    %c0_7 = arith.constant 0 : index
    %c0_8 = arith.constant 0 : index
    %11 = vector.load %arg10[%c0_7, %c0_8] : memref<1x128xf32, #tpu.memory_space<vmem>>, vector<1x128xf32>
    tpu.vector_store %arg10[%c0_7, %c0_8], %10 {strides = array<i32>} : memref<1x128xf32, #tpu.memory_space<vmem>>, vector<1x128xf32>,
    %12 = vector.extract_strided_slice %7 {offsets = [0, 0], sizes = [64, 128], strides = [1, 1]} : vector<72x128xf32> to vector<64x128xf32>
    %c0_9 = arith.constant 0 : index
    %c0_10 = arith.constant 0 : index
    %13 = vector.load %arg5[%c0_9, %c0_10] : memref<64x1xf32, #tpu.memory_space<vmem>>, vector<64x1xf32>
    %14 = vector.broadcast %13 : vector<64x1xf32> to vector<64x128xf32>
    %15 = arith.addf %12, %14 : vector<64x128xf32>
    %cst_11 = arith.constant 0.000000e+00 : f32
    %16 = vector.broadcast %cst_11 : f32 to vector<64x128xf32>
    %17 = arith.maximumf %15, %16 : vector<64x128xf32>
    %c0_12 = arith.constant 0 : index
    %c0_13 = arith.constant 0 : index
    %18 = vector.load %arg6[%c0_12, %c0_13] : memref<64x64xf32, #tpu.memory_space<vmem>>, vector<64x64xf32>
    %cst_14 = arith.constant dense<0.000000e+00> : vector<64x128xf32>
    %19 = tpu.matmul %18, %17, %cst_14 {dimension_numbers = #tpu.dot_dimension_numbers<[1], [0], [0], [1], [0, 0, 1, 1], [], []>} : vector<64x64xf32>, vector<64x128xf32>, vector<64x128xf32> -> vector<64x128xf32>
    %c0_15 = arith.constant 0 : index
    %c0_16 = arith.constant 0 : index
    %20 = vector.load %arg7[%c0_15, %c0_16] : memref<64x1xf32, #tpu.memory_space<vmem>>, vector<64x1xf32>
    %21 = vector.broadcast %20 : vector<64x1xf32> to vector<64x128xf32>
    %22 = arith.addf %19, %21 : vector<64x128xf32>
    %cst_17 = arith.constant 0.000000e+00 : f32
    %23 = vector.broadcast %cst_17 : f32 to vector<64x128xf32>
    %24 = arith.maximumf %22, %23 : vector<64x128xf32>
    %c0_18 = arith.constant 0 : index
    %c0_19 = arith.constant 0 : index
    %25 = vector.load %arg8[%c0_18, %c0_19] : memref<1x64xf32, #tpu.memory_space<vmem>>, vector<1x64xf32>
    %cst_20 = arith.constant dense<0.000000e+00> : vector<1x128xf32>
    %26 = tpu.matmul %25, %24, %cst_20 {dimension_numbers = #tpu.dot_dimension_numbers<[1], [0], [0], [1], [0, 0, 1, 1], [], []>} : vector<1x64xf32>, vector<64x128xf32>, vector<1x128xf32> -> vector<1x128xf32>
    %c0_21 = arith.constant 0 : index
    %c0_22 = arith.constant 0 : index
    %27 = vector.load %arg9[%c0_21, %c0_22] : memref<1x1xf32, #tpu.memory_space<vmem>>, vector<1x1xf32>
    %28 = vector.broadcast %27 : vector<1x1xf32> to vector<1x128xf32>
    %29 = arith.addf %26, %28 : vector<1x128xf32>
    %c0_23 = arith.constant 0 : index
    %c0_24 = arith.constant 0 : index
    %30 = vector.load %arg11[%c0_23, %c0_24] : memref<1x128xf32, #tpu.memory_space<vmem>>, vector<1x128xf32>
    tpu.vector_store %arg11[%c0_23, %c0_24], %29 {strides = array<i32>} : memref<1x128xf32, #tpu.memory_space<vmem>>, vector<1x128xf32>,
    return
  }
  func.func @transform_0(%arg0: i32) -> (i32, i32) {
    %c0_i32 = arith.constant 0 : i32
    %c0_i32_0 = arith.constant 0 : i32
    return %c0_i32, %arg0 : i32, i32
  }
  func.func @transform_1(%arg0: i32) -> (i32, i32) {
    %c0_i32 = arith.constant 0 : i32
    %c0_i32_0 = arith.constant 0 : i32
    return %c0_i32, %arg0 : i32, i32
  }
  func.func @transform_2(%arg0: i32) -> (i32, i32) {
    %c0_i32 = arith.constant 0 : i32
    %c0_i32_0 = arith.constant 0 : i32
    return %c0_i32, %arg0 : i32, i32
  }
  func.func @transform_3(%arg0: i32) -> (i32, i32) {
    %c0_i32 = arith.constant 0 : i32
    %c0_i32_0 = arith.constant 0 : i32
    %c0_i32_1 = arith.constant 0 : i32
    return %c0_i32, %c0_i32_0 : i32, i32
  }
  func.func @transform_4(%arg0: i32) -> (i32, i32) {
    %c0_i32 = arith.constant 0 : i32
    %c0_i32_0 = arith.constant 0 : i32
    %c0_i32_1 = arith.constant 0 : i32
    return %c0_i32, %c0_i32_0 : i32, i32
  }
  func.func @transform_5(%arg0: i32) -> (i32, i32) {
    %c0_i32 = arith.constant 0 : i32
    %c0_i32_0 = arith.constant 0 : i32
    %c0_i32_1 = arith.constant 0 : i32
    return %c0_i32, %c0_i32_0 : i32, i32
  }
  func.func @transform_6(%arg0: i32) -> (i32, i32) {
    %c0_i32 = arith.constant 0 : i32
    %c0_i32_0 = arith.constant 0 : i32
    %c0_i32_1 = arith.constant 0 : i32
    return %c0_i32, %c0_i32_0 : i32, i32
  }
  func.func @transform_7(%arg0: i32) -> (i32, i32) {
    %c0_i32 = arith.constant 0 : i32
    %c0_i32_0 = arith.constant 0 : i32
    %c0_i32_1 = arith.constant 0 : i32
    return %c0_i32, %c0_i32_0 : i32, i32
  }
  func.func @transform_8(%arg0: i32) -> (i32, i32) {
    %c0_i32 = arith.constant 0 : i32
    %c0_i32_0 = arith.constant 0 : i32
    %c0_i32_1 = arith.constant 0 : i32
    return %c0_i32, %c0_i32_0 : i32, i32
  }
  func.func @transform_9(%arg0: i32) -> (i32, i32) {
    %c0_i32 = arith.constant 0 : i32
    %c0_i32_0 = arith.constant 0 : i32
    return %c0_i32, %arg0 : i32, i32
  }
  func.func @transform_10(%arg0: i32) -> (i32, i32) {
    %c0_i32 = arith.constant 0 : i32
    %c0_i32_0 = arith.constant 0 : i32
    return %c0_i32, %arg0 : i32, i32
  }
}

</mosaic_0001>

<llo_original>
// kernel: tpu_custom_call.1
$region0: #{tpu_custom_call.1}
  #allocation0 [shape = 'u32[]', space=smem, size = 0x4, offset = 0x4, fixed_abs, tag = 'smem constant byte address 0x4 - core index']
  #allocation1 [shape = 'u32[72,128]{1,0:T(1,128)}', space=vmem, size = 0x9000, scoped, tag = 'internal scratch']
  #allocation2 [shape = 'f32[1,1]{1,0:T(1,128)S(1)}', space=vmem, size = 0x200, scoped, tag = 'scoped memory for tpu_custom_call.1']
  %s0 = inlined_call_operand.vmem [shape: bf16[32,128], index: 0, kind: input, shape index: {}]
  %s1 = inlined_call_operand.vmem [shape: bf16[32,128], index: 1, kind: input, shape index: {}]
  %s2 = inlined_call_operand.vmem [shape: f32[1,128], index: 2, kind: input, shape index: {}]
  %s3 = inlined_call_operand.vmem [shape: f32[72,96], index: 3, kind: input, shape index: {}]
  %s4 = inlined_call_operand.vmem [shape: f32[64,1], index: 4, kind: input, shape index: {}]
  %s5 = inlined_call_operand.hbm [shape: f32[64,64], index: 5, kind: input, shape index: {}]
  %s6 = inlined_call_operand.vmem [shape: f32[64,1], index: 6, kind: input, shape index: {}]
  %s7 = inlined_call_operand.vmem [shape: f32[1,64], index: 7, kind: input, shape index: {}]
  %s8 = inlined_call_operand.<no memory space> [shape: f32[1,1], index: 8, kind: input, shape index: {}]
  %s9 = inlined_call_operand.hbm [shape: f32[1,128], index: 9, kind: output, shape index: {0}]
  %s10 = inlined_call_operand.hbm [shape: f32[1,128], index: 10, kind: output, shape index: {1}]
  %11 = xla_tuple %s9, %s10
  %s12 = sld [smem:[#allocation0]]
  $region58: #{tpu_custom_call.1} parent=0
    _
  %s14 = ssub.s32 1, %s12
  %s15 = scalar_select 0, %s14, %s12
  %v16 = vstv %s8
  %17 = vst [vmem:[#allocation2] sm:$0x1] %v16
  $region1: #{tpu_custom_call.1} parent=0
    #allocation3 [shape = 'u8[32768]{0}', space=vmem, size = 0x8000, scoped, tag = 'input window, operand 5, single buffered']
    #allocation4 [shape = 's32[1]{0}', space=sflag, size = 0x4, scoped, tag = 'scoped memory for tpu_custom_call.1']
    #allocation5 [shape = 's32[1]{0}', space=sflag, size = 0x4, scoped, tag = 'scoped memory for tpu_custom_call.1']
    #allocation6 [shape = 'u8[512]{0}', space=vmem, size = 0x400, scoped, tag = 'output window, operand 0, single buffered']
    #allocation7 [shape = 'u8[512]{0}', space=vmem, size = 0x400, scoped, tag = 'output window, operand 1, single buffered']
    #allocation8 [shape = 's32[1]{0}', space=sflag, size = 0x4, scoped, tag = 'scoped memory for tpu_custom_call.1']
    %18 = vsyncpa [#allocation4], 0
    %19 = vsyncpa [#allocation5], 0
    %20 = vsyncpa [#allocation8], 0
    // Predicated region
    $region2: #{tpu_custom_call.1} parent=1 // pred_check
      _
    $region3: #{tpu_custom_call.1} parent=1 // pred_check_branch
      %22 = sbr.rel (0) target = $region5
    $region4: #{tpu_custom_call.1} parent=1 // pred_region
      _
    $region5: #{tpu_custom_call.1} parent=1 // pred_fallthru
      _
    // Predicated region
    $region6: #{tpu_custom_call.1} parent=1 // pred_check
      _
    $region7: #{tpu_custom_call.1} parent=1 // pred_check_branch
      %24 = sbr.rel (0) target = $region9
    $region8: #{tpu_custom_call.1} parent=1 // pred_region
      _
    $region9: #{tpu_custom_call.1} parent=1 // pred_fallthru
      _
    // Predicated region
    $region10: #{tpu_custom_call.1} parent=1 // pred_check
      _
    $region11: #{tpu_custom_call.1} parent=1 // pred_check_branch
      %26 = sbr.rel (0) target = $region13
    $region12: #{tpu_custom_call.1} parent=1 // pred_region
      _
    $region13: #{tpu_custom_call.1} parent=1 // pred_fallthru
      _
    // Predicated region
    $region14: #{tpu_custom_call.1} parent=1 // pred_check
      _
    $region15: #{tpu_custom_call.1} parent=1 // pred_check_branch
      %28 = sbr.rel (0) target = $region17
    $region16: #{tpu_custom_call.1} parent=1 // pred_region
      _
    $region17: #{tpu_custom_call.1} parent=1 // pred_fallthru
      _
    // Predicated region
    $region18: #{tpu_custom_call.1} parent=1 // pred_check
      _
    $region19: #{tpu_custom_call.1} parent=1 // pred_check_branch
      %30 = sbr.rel (0) target = $region21
    $region20: #{tpu_custom_call.1} parent=1 // pred_region
      _
    $region21: #{tpu_custom_call.1} parent=1 // pred_fallthru
      _
    // Predicated region
    $region22: #{tpu_custom_call.1} parent=1 // pred_check
      _
    $region23: #{tpu_custom_call.1} parent=1 // pred_check_branch
      %32 = sbr.rel (0) target = $region25
    $region24: #{tpu_custom_call.1} parent=1 // pred_region
      %34 = vsyncadd [#allocation4], 0
      %s35 = sshll.u32 %s5, 4
      %s36 = int_to_ptr.hbm [resolvable:$true] %s35
      %s37 = sshll.u32 [#allocation3], 4
      %s38 = int_to_ptr.vmem [resolvable:$true] %s37
      %43 = dma.hbm_to_vmem [thread:$0]  %s36, 1024, %s38, [#allocation4], 128, 128, 8
    $region25: #{tpu_custom_call.1} parent=1 // pred_fallthru
      _
    // Predicated region
    $region26: #{tpu_custom_call.1} parent=1 // pred_check
      _
    $region27: #{tpu_custom_call.1} parent=1 // pred_check_branch
      %45 = sbr.rel (0) target = $region29
    $region28: #{tpu_custom_call.1} parent=1 // pred_region
      _
    $region29: #{tpu_custom_call.1} parent=1 // pred_fallthru
      _
    // Predicated region
    $region30: #{tpu_custom_call.1} parent=1 // pred_check
      _
    $region31: #{tpu_custom_call.1} parent=1 // pred_check_branch
      %47 = sbr.rel (0) target = $region33
    $region32: #{tpu_custom_call.1} parent=1 // pred_region
      _
    $region33: #{tpu_custom_call.1} parent=1 // pred_fallthru
      _
    // Predicated region
    $region34: #{tpu_custom_call.1} parent=1 // pred_check
      _
    $region35: #{tpu_custom_call.1} parent=1 // pred_check_branch
      %49 = sbr.rel (0) target = $region37
    $region36: #{tpu_custom_call.1} parent=1 // pred_region
      _
    $region37: #{tpu_custom_call.1} parent=1 // pred_fallthru
      _
    // Predicated region
    $region38: #{tpu_custom_call.1} parent=1 // pred_check
      _
    $region39: #{tpu_custom_call.1} parent=1 // pred_check_branch
      %51 = sbr.rel (0) target = $region41
    $region40: #{tpu_custom_call.1} parent=1 // pred_region
      %53 = dma.done [#allocation4], 1024
    $region41: #{tpu_custom_call.1} parent=1 // pred_fallthru
      _
    %v54 = vld [vmem:[%s0] sm:$0xf]
    %v55 = vld [vmem:[%s0 + $0x4] sm:$0xf]
    %v56 = vld [vmem:[%s0 + $0x8] sm:$0xf]
    %v57 = vld [vmem:[%s0 + $0xc] sm:$0xf]
    %v58 = vunpack.c.l.bf16 %v54
    %v59 = vunpack.c.l.bf16 %v55
    %v60 = vunpack.c.l.bf16 %v56
    %v61 = vunpack.c.l.bf16 %v57
    %v62 = vld [vmem:[%s1] sm:$0xf]
    %v63 = vld [vmem:[%s1 + $0x4] sm:$0xf]
    %v64 = vld [vmem:[%s1 + $0x8] sm:$0xf]
    %v65 = vld [vmem:[%s1 + $0xc] sm:$0xf]
    %v66 = vunpack.c.l.bf16 %v62
    %v67 = vunpack.c.l.bf16 %v63
    %v68 = vunpack.c.l.bf16 %v64
    %v69 = vunpack.c.l.bf16 %v65
    %v70 = vmul.f32 %v58, %v66
    %v71 = vmul.f32 %v59, %v67
    %v72 = vmul.f32 %v60, %v68
    %v73 = vmul.f32 %v61, %v69
    %v74 = vld [vmem:[%s3] sm:$0xff]
    %v75 = vld [vmem:[%s3 + $0x8] sm:$0xff]
    %v76 = vld [vmem:[%s3 + $0x10] sm:$0xff]
    %v77 = vld [vmem:[%s3 + $0x18] sm:$0xff]
    %v78 = vld [vmem:[%s3 + $0x20] sm:$0xff]
    %v79 = vld [vmem:[%s3 + $0x28] sm:$0xff]
    %v80 = vld [vmem:[%s3 + $0x30] sm:$0xff]
    %v81 = vld [vmem:[%s3 + $0x38] sm:$0xff]
    %v82 = vld [vmem:[%s3 + $0x40] sm:$0xff]
    %vm83 = vcmask 785408
    %v85 = vsel %vm83, %v74, 0
    %v88 = vsel %vm83, %v75, 0
    %v91 = vsel %vm83, %v76, 0
    %v94 = vsel %vm83, %v77, 0
    %v97 = vsel %vm83, %v78, 0
    %v100 = vsel %vm83, %v79, 0
    %v103 = vsel %vm83, %v80, 0
    %v106 = vsel %vm83, %v81, 0
    %v109 = vsel %vm83, %v82, 0
    %111 = vmatpush.msra.mxu0 0.0
    %112 = vmatpush.msra.mxu0 0.0
    %113 = vmatpush.msra.mxu0 0.0
    %114 = vmatpush.msra.mxu0 0.0
    %115 = vmatpush.msra.mxu0 %v73
    %116 = vmatpush.msra.mxu0 %v72
    %117 = vmatpush.msra.mxu0 %v71
    %118 = vmatpush.msra.mxu0 %v70
    %119 = vmatpush.msra.mxu0 %v69
    %120 = vmatpush.msra.mxu0 %v68
    %121 = vmatpush.msra.mxu0 %v67
    %122 = vmatpush.msra.mxu0 %v66
    %123 = vmatpush.msra.mxu0 %v61
    %124 = vmatpush.msra.mxu0 %v60
    %125 = vmatpush.msra.mxu0 %v59
    %126 = vmatpush.msra.mxu0 %v58
    %127 = vmatmul.f32.gmra.mxu0 %v85
    %v128 = vpop.f32.mrf.mxu0
    %v129 = vadd.f32 0.0, %v128
    %130 = vmatmul.f32.gmra.mxu0 %v88
    %v131 = vpop.f32.mrf.mxu0
    %v132 = vadd.f32 0.0, %v131
    %133 = vmatmul.f32.gmra.mxu0 %v91
    %v134 = vpop.f32.mrf.mxu0
    %v135 = vadd.f32 0.0, %v134
    %136 = vmatmul.f32.gmra.mxu0 %v94
    %v137 = vpop.f32.mrf.mxu0
    %v138 = vadd.f32 0.0, %v137
    %139 = vmatmul.f32.gmra.mxu0 %v97
    %v140 = vpop.f32.mrf.mxu0
    %v141 = vadd.f32 0.0, %v140
    %142 = vmatmul.f32.gmra.mxu0 %v100
    %v143 = vpop.f32.mrf.mxu0
    %v144 = vadd.f32 0.0, %v143
    %145 = vmatmul.f32.gmra.mxu0 %v103
    %v146 = vpop.f32.mrf.mxu0
    %v147 = vadd.f32 0.0, %v146
    %148 = vmatmul.f32.gmra.mxu0 %v106
    %v149 = vpop.f32.mrf.mxu0
    %v150 = vadd.f32 0.0, %v149
    %151 = vmatmul.f32.gmra.mxu0 %v109
    %v152 = vpop.f32.mrf.mxu0
    %v153 = vadd.f32 0.0, %v152
    %154 = vdwg.mxu0
    %v155 = vld [vmem:[%s2] sm:$0x1]
    %v156 = vadd.f32 %v153, %v155
    %157 = vst [vmem:[#allocation6] sm:$0x1] %v156
    %v158 = vld [vmem:[%s4] sm:$0xff]
    %v159 = vld [vmem:[%s4 + $0x8] sm:$0xff]
    %v160 = vld [vmem:[%s4 + $0x10] sm:$0xff]
    %v161 = vld [vmem:[%s4 + $0x18] sm:$0xff]
    %v162 = vld [vmem:[%s4 + $0x20] sm:$0xff]
    %v163 = vld [vmem:[%s4 + $0x28] sm:$0xff]
    %v164 = vld [vmem:[%s4 + $0x30] sm:$0xff]
    %v165 = vld [vmem:[%s4 + $0x38] sm:$0xff]
    %167 = vset.pattern.permute.xlu0 0
    %168 = vperm.xlu0 %167, %v158
    %v169 = vpop.permute.xlu0 %168
    %172 = vset.pattern.permute.xlu0 0
    %173 = vperm.xlu0 %172, %v159
    %v174 = vpop.permute.xlu0 %173
    %177 = vset.pattern.permute.xlu0 0
    %178 = vperm.xlu0 %177, %v160
    %v179 = vpop.permute.xlu0 %178
    %182 = vset.pattern.permute.xlu0 0
    %183 = vperm.xlu0 %182, %v161
    %v184 = vpop.permute.xlu0 %183
    %187 = vset.pattern.permute.xlu0 0
    %188 = vperm.xlu0 %187, %v162
    %v189 = vpop.permute.xlu0 %188
    %192 = vset.pattern.permute.xlu0 0
    %193 = vperm.xlu0 %192, %v163
    %v194 = vpop.permute.xlu0 %193
    %197 = vset.pattern.permute.xlu0 0
    %198 = vperm.xlu0 %197, %v164
    %v199 = vpop.permute.xlu0 %198
    %202 = vset.pattern.permute.xlu0 0
    %203 = vperm.xlu0 %202, %v165
    %v204 = vpop.permute.xlu0 %203
    %v206 = vadd.f32 %v129, %v169
    %v207 = vadd.f32 %v132, %v174
    %v208 = vadd.f32 %v135, %v179
    %v209 = vadd.f32 %v138, %v184
    %v210 = vadd.f32 %v141, %v189
    %v211 = vadd.f32 %v144, %v194
    %v212 = vadd.f32 %v147, %v199
    %v213 = vadd.f32 %v150, %v204
    %v214 = vmax.f32 %v206, 0.0
    %v215 = vmax.f32 %v207, 0.0
    %v216 = vmax.f32 %v208, 0.0
    %v217 = vmax.f32 %v209, 0.0
    %v218 = vmax.f32 %v210, 0.0
    %v219 = vmax.f32 %v211, 0.0
    %v220 = vmax.f32 %v212, 0.0
    %v221 = vmax.f32 %v213, 0.0
    %v222 = vld [vmem:[#allocation3] sm:$0xff]
    %v223 = vld [vmem:[#allocation3 + $0x8] sm:$0xff]
    %v224 = vld [vmem:[#allocation3 + $0x10] sm:$0xff]
    %v225 = vld [vmem:[#allocation3 + $0x18] sm:$0xff]
    %v226 = vld [vmem:[#allocation3 + $0x20] sm:$0xff]
    %v227 = vld [vmem:[#allocation3 + $0x28] sm:$0xff]
    %v228 = vld [vmem:[#allocation3 + $0x30] sm:$0xff]
    %v229 = vld [vmem:[#allocation3 + $0x38] sm:$0xff]
    %v230 = vld [vmem:[%s6] sm:$0xff]
    %v231 = vld [vmem:[%s6 + $0x8] sm:$0xff]
    %v232 = vld [vmem:[%s6 + $0x10] sm:$0xff]
    %v233 = vld [vmem:[%s6 + $0x18] sm:$0xff]
    %v234 = vld [vmem:[%s6 + $0x20] sm:$0xff]
    %v235 = vld [vmem:[%s6 + $0x28] sm:$0xff]
    %v236 = vld [vmem:[%s6 + $0x30] sm:$0xff]
    %v237 = vld [vmem:[%s6 + $0x38] sm:$0xff]
    %239 = vset.pattern.permute.xlu0 0
    %240 = vperm.xlu0 %239, %v230
    %v241 = vpop.permute.xlu0 %240
    %244 = vset.pattern.permute.xlu0 0
    %245 = vperm.xlu0 %244, %v231
    %v246 = vpop.permute.xlu0 %245
    %249 = vset.pattern.permute.xlu0 0
    %250 = vperm.xlu0 %249, %v232
    %v251 = vpop.permute.xlu0 %250
    %254 = vset.pattern.permute.xlu0 0
    %255 = vperm.xlu0 %254, %v233
    %v256 = vpop.permute.xlu0 %255
    %259 = vset.pattern.permute.xlu0 0
    %260 = vperm.xlu0 %259, %v234
    %v261 = vpop.permute.xlu0 %260
    %264 = vset.pattern.permute.xlu0 0
    %265 = vperm.xlu0 %264, %v235
    %v266 = vpop.permute.xlu0 %265
    %269 = vset.pattern.permute.xlu0 0
    %270 = vperm.xlu0 %269, %v236
    %v271 = vpop.permute.xlu0 %270
    %274 = vset.pattern.permute.xlu0 0
    %275 = vperm.xlu0 %274, %v237
    %v276 = vpop.permute.xlu0 %275
    %vm278 = vcmask 523264
    %v280 = vsel %vm278, %v222, 0
    %v283 = vsel %vm278, %v223, 0
    %v286 = vsel %vm278, %v224, 0
    %v289 = vsel %vm278, %v225, 0
    %v292 = vsel %vm278, %v226, 0
    %v295 = vsel %vm278, %v227, 0
    %v298 = vsel %vm278, %v228, 0
    %v301 = vsel %vm278, %v229, 0
    %303 = vmatpush.msra.mxu0 0.0
    %304 = vmatpush.msra.mxu0 0.0
    %305 = vmatpush.msra.mxu0 0.0
    %306 = vmatpush.msra.mxu0 0.0
    %307 = vmatpush.msra.mxu0 0.0
    %308 = vmatpush.msra.mxu0 0.0
    %309 = vmatpush.msra.mxu0 0.0
    %310 = vmatpush.msra.mxu0 0.0
    %311 = vmatpush.msra.mxu0 %v221
    %312 = vmatpush.msra.mxu0 %v220
    %313 = vmatpush.msra.mxu0 %v219
    %314 = vmatpush.msra.mxu0 %v218
    %315 = vmatpush.msra.mxu0 %v217
    %316 = vmatpush.msra.mxu0 %v216
    %317 = vmatpush.msra.mxu0 %v215
    %318 = vmatpush.msra.mxu0 %v214
    %319 = vmatmul.f32.gmra.mxu0 %v280
    %v320 = vpop.f32.mrf.mxu0
    %v321 = vadd.f32 %v241, %v320
    %322 = vmatmul.f32.gmra.mxu0 %v283
    %v323 = vpop.f32.mrf.mxu0
    %v324 = vadd.f32 %v246, %v323
    %325 = vmatmul.f32.gmra.mxu0 %v286
    %v326 = vpop.f32.mrf.mxu0
    %v327 = vadd.f32 %v251, %v326
    %328 = vmatmul.f32.gmra.mxu0 %v289
    %v329 = vpop.f32.mrf.mxu0
    %v330 = vadd.f32 %v256, %v329
    %331 = vmatmul.f32.gmra.mxu0 %v292
    %v332 = vpop.f32.mrf.mxu0
    %v333 = vadd.f32 %v261, %v332
    %334 = vmatmul.f32.gmra.mxu0 %v295
    %v335 = vpop.f32.mrf.mxu0
    %v336 = vadd.f32 %v266, %v335
    %337 = vmatmul.f32.gmra.mxu0 %v298
    %v338 = vpop.f32.mrf.mxu0
    %v339 = vadd.f32 %v271, %v338
    %340 = vmatmul.f32.gmra.mxu0 %v301
    %v341 = vpop.f32.mrf.mxu0
    %v342 = vadd.f32 %v276, %v341
    %343 = vdwg.mxu0
    %v344 = vmax.f32 %v321, 0.0
    %v345 = vmax.f32 %v324, 0.0
    %v346 = vmax.f32 %v327, 0.0
    %v347 = vmax.f32 %v330, 0.0
    %v348 = vmax.f32 %v333, 0.0
    %v349 = vmax.f32 %v336, 0.0
    %v350 = vmax.f32 %v339, 0.0
    %v351 = vmax.f32 %v342, 0.0
    %v352 = vld [vmem:[%s7] sm:$0x1]
    %v353 = vld [vmem:[#allocation2] sm:$0x1]
    %355 = vset.pattern.permute.xlu0 0
    %356 = vperm.xlu0 %355, %v353
    %v357 = vpop.permute.xlu0 %356
    %v359 = vperm.slane %v357, 0
    %v361 = vsel %vm278, %v352, 0
    %363 = vmatpush.msra.mxu0 0.0
    %364 = vmatpush.msra.mxu0 0.0
    %365 = vmatpush.msra.mxu0 0.0
    %366 = vmatpush.msra.mxu0 0.0
    %367 = vmatpush.msra.mxu0 0.0
    %368 = vmatpush.msra.mxu0 0.0
    %369 = vmatpush.msra.mxu0 0.0
    %370 = vmatpush.msra.mxu0 0.0
    %371 = vmatpush.msra.mxu0 %v351
    %372 = vmatpush.msra.mxu0 %v350
    %373 = vmatpush.msra.mxu0 %v349
    %374 = vmatpush.msra.mxu0 %v348
    %375 = vmatpush.msra.mxu0 %v347
    %376 = vmatpush.msra.mxu0 %v346
    %377 = vmatpush.msra.mxu0 %v345
    %378 = vmatpush.msra.mxu0 %v344
    %379 = vmatmul.f32.gmra.mxu0 %v361
    %v380 = vpop.f32.mrf.mxu0
    %v381 = vadd.f32 %v359, %v380
    %382 = vdwg.mxu0
    %383 = vst [vmem:[#allocation7] sm:$0x1] %v381
    // Predicated region
    $region42: #{tpu_custom_call.1} parent=1 // pred_check
      _
    $region43: #{tpu_custom_call.1} parent=1 // pred_check_branch
      %385 = sbr.rel (0) target = $region45
    $region44: #{tpu_custom_call.1} parent=1 // pred_region
      %387 = vsyncadd [#allocation5], 0
      %s389 = sshll.u32 [#allocation6], 4
      %s390 = int_to_ptr.vmem [resolvable:$true] %s389
      %s391 = sshll.u32 %s9, 4
      %s392 = int_to_ptr.hbm [resolvable:$true] %s391
      %394 = dma.vmem_to_hbm [thread:$0]  %s390, 16, %s392, [#allocation5]
    $region45: #{tpu_custom_call.1} parent=1 // pred_fallthru
      _
    // Predicated region
    $region46: #{tpu_custom_call.1} parent=1 // pred_check
      _
    $region47: #{tpu_custom_call.1} parent=1 // pred_check_branch
      %396 = sbr.rel (0) target = $region49
    $region48: #{tpu_custom_call.1} parent=1 // pred_region
      %398 = vsyncadd [#allocation8], 0
      %s400 = sshll.u32 [#allocation7], 4
      %s401 = int_to_ptr.vmem [resolvable:$true] %s400
      %s402 = sshll.u32 %s10, 4
      %s403 = int_to_ptr.hbm [resolvable:$true] %s402
      %405 = dma.vmem_to_hbm [thread:$0]  %s401, 16, %s403, [#allocation8]
    $region49: #{tpu_custom_call.1} parent=1 // pred_fallthru
      _
    // Predicated region
    $region50: #{tpu_custom_call.1} parent=1 // pred_check
      _
    $region51: #{tpu_custom_call.1} parent=1 // pred_check_branch
      %407 = sbr.rel (0) target = $region53
    $region52: #{tpu_custom_call.1} parent=1 // pred_region
      %409 = dma.done [#allocation5], 16
    $region53: #{tpu_custom_call.1} parent=1 // pred_fallthru
      _
    // Predicated region
    $region54: #{tpu_custom_call.1} parent=1 // pred_check
      _
    $region55: #{tpu_custom_call.1} parent=1 // pred_check_branch
      %411 = sbr.rel (0) target = $region57
    $region56: #{tpu_custom_call.1} parent=1 // pred_region
      %413 = dma.done [#allocation8], 16
    $region57: #{tpu_custom_call.1} parent=1 // pred_fallthru
      _
    %414 = vsyncpa [#allocation4], 1
    %415 = vsyncpa [#allocation5], 1
    %416 = vsyncpa [#allocation8], 1

</llo_original>
